<compile_context>
chip_gen: v6e
topology: v6e:2x2x1
jax: 0.10.0
libtpu: 0.0.40
codegen_flags: <defaults>
</compile_context>

<pallas_src>
import functools

import jax
import jax.numpy as jnp
from jax.experimental import pallas as pl
from jax.experimental.pallas import tpu as pltpu

# ----- small, forward-consistent shapes -----
BATCH = 8
STATE_DIM = 8
ACTION_DIM = 4
CONTEXT_DIM = 4
HIDDEN = 32
Z_MAX = 10.0
ROLLOUT_STEPS = 8


# --------------------------------------------------------------------------
# fused A/B hypernet on pre-packed parameters
#   slab1 = [ w1a | w1b ;  b1a | b1b ]                                 (C+1, 2H)
#   slab2 = [ blockdiag(w2a*adj_xx, w2b*adj_xu) ;  b2a*adj_xx | b2b*adj_xu | 0-pad ]
#                                                                      (2H+1, NPAD)
#   g     = stacked 0/1 group-sum matrix (len-S groups, len-Au groups, 0-pad rows)
#                                                                      (NPAD, S)
# --------------------------------------------------------------------------
def _hypernet(ctx, slab1_ref, slab2_ref, context_dim):
    c = context_dim
    w1 = slab1_ref[0:c, :]                                   # (C, 2H)
    b1 = slab1_ref[c:c + 1, :]                               # (1, 2H)
    h = jnp.tanh(jnp.dot(ctx, w1, preferred_element_type=jnp.float32) + b1)
    h2 = slab2_ref.shape[0] - 1
    w2 = slab2_ref[0:h2, :]                                  # (2H, NPAD), masks folded
    b2 = slab2_ref[h2:h2 + 1, :]                             # (1,  NPAD)
    return jnp.dot(h, w2, preferred_element_type=jnp.float32) + b2   # (M, NPAD)


def _forward_kernel(state_dim, action_dim, context_dim,
                    x_ref, u_ref, ctx_ref, slab1_ref, slab2_ref, g_ref, o_ref):
    s, au = state_dim, action_dim
    x = x_ref[...].astype(jnp.float32)
    u = u_ref[...].astype(jnp.float32)
    ctx = ctx_ref[...].astype(jnp.float32)

    ab = _hypernet(ctx, slab1_ref, slab2_ref, context_dim)           # (B, NPAD)

    npad = slab2_ref.shape[1]
    pad = npad - (s * s + s * au)
    pieces = [jnp.tile(x, (1, s)), jnp.tile(u, (1, s))]
    if pad > 0:
        pieces.append(jnp.zeros((x.shape[0], pad), jnp.float32))
    rep = jnp.concatenate(pieces, axis=-1)                            # (B, NPAD)

    # contiguous group sums via 0/1 matrix -> MXU reduction; yields y_a + y_b directly
    y = jnp.dot(ab * rep, g_ref[...], preferred_element_type=jnp.float32)   # (B, S)
    o_ref[...] = y.astype(o_ref.dtype)


def _rollout_kernel(state_dim, action_dim, context_dim, n_steps, z_max,
                    x0_ref, ctx_ref, us_ref, slab1_ref, slab2_ref, g_ref, o_ref):
    s, au, t_steps = state_dim, action_dim, n_steps
    b = x0_ref.shape[0]
    na, nb = s * s, s * au
    inv_z = 1.0 / z_max

    x = x0_ref[...].astype(jnp.float32)               # (B, S)
    ctx = ctx_ref[...].astype(jnp.float32)            # (B, C)
    us = us_ref[...].astype(jnp.float32)              # (B, T, Au)

    # ---- context-only hypernet pre-pass, batched over all T steps (M = B*T rows) ----
    ctx_all = jnp.stack([ctx + (t * inv_z) for t in range(t_steps)], axis=1)   # (B, T, C)
    ab_all = _hypernet(ctx_all.reshape(b * t_steps, context_dim),
                       slab1_ref, slab2_ref, context_dim)                      # (B*T, NPAD)

    # B_t @ u_t contribution for every step in one group-sum matmul
    b_all = ab_all[:, na:na + nb]                                              # (B*T, S*Au)
    u_rep = jnp.tile(us.reshape(b * t_steps, au), (1, s))                      # (B*T, S*Au)
    g_b = g_ref[na:na + nb, :]                                                 # (S*Au, S)
    yb_all = jnp.dot(b_all * u_rep, g_b,
                     preferred_element_type=jnp.float32).reshape(b, t_steps, s)  # (B, T, S)

    a_all = ab_all[:, 0:na].reshape(b, t_steps, na)                            # (B, T, S*S)
    g_a = g_ref[0:na, :]                                                       # (S*S, S)

    # ---- short sequential chain: one small group-sum matmul per step ----
    ys = []
    for t in range(t_steps):                                                   # static unroll
        y = jnp.dot(a_all[:, t, :] * jnp.tile(x, (1, s)), g_a,
                    preferred_element_type=jnp.float32) + yb_all[:, t, :]      # (B, S)
        ys.append(y)
        x = y

    o_ref[...] = jnp.stack(ys, axis=1).astype(o_ref.dtype)                     # (B, T, S)


# --------------------------------------------------------------------------
# wrappers
# --------------------------------------------------------------------------
def time_variant_hyper_linear_ssm(x, u, context, packed):
    """forward(x, u, context) = A(x, context) + B(u, context)."""
    B, S = x.shape
    Au = u.shape[-1]
    C = context.shape[-1]
    vmem = pl.BlockSpec(memory_space=pltpu.MemorySpace.VMEM)
    return pl.pallas_call(
        functools.partial(_forward_kernel, S, Au, C),
        out_shape=jax.ShapeDtypeStruct((B, S), jnp.float32),
        in_specs=[vmem] * 6,
        out_specs=vmem,
    )(x, u, context, packed["slab1"], packed["slab2"], packed["g"])


def time_variant_hyper_linear_ssm_rollout(x0, context, us, packed, z_max):
    """rollout(x0, context, us) with us of shape (B, T, Au); returns (B, T, S)."""
    B, S = x0.shape
    T, Au = us.shape[1], us.shape[2]
    C = context.shape[-1]
    vmem = pl.BlockSpec(memory_space=pltpu.MemorySpace.VMEM)
    # Single grid-less program: all inputs + full output VMEM-resident, one writeback.
    return pl.pallas_call(
        functools.partial(_rollout_kernel, S, Au, C, T, float(z_max)),
        out_shape=jax.ShapeDtypeStruct((B, T, S), jnp.float32),
        in_specs=[vmem] * 6,
        out_specs=vmem,
    )(x0, context, us, packed["slab1"], packed["slab2"], packed["g"])


# --------------------------------------------------------------------------
# parameter construction / packing (amortized: done once at init, not per call)
# --------------------------------------------------------------------------
def init_params(key):
    ks = jax.random.split(key, 8)

    def lin_w(k, fan_in, fan_out):
        return (jax.random.normal(k, (fan_in, fan_out), jnp.float32)
                / jnp.sqrt(jnp.float32(fan_in)))

    return {
        # a_net: context -> hidden -> tanh -> state_dim * state_dim
        "w1a": lin_w(ks[0], CONTEXT_DIM, HIDDEN),
        "b1a": 0.1 * jax.random.normal(ks[1], (1, HIDDEN), jnp.float32),
        "w2a": lin_w(ks[2], HIDDEN, STATE_DIM * STATE_DIM),
        "b2a": 0.1 * jax.random.normal(ks[3], (1, STATE_DIM * STATE_DIM), jnp.float32),
        # b_net: context -> hidden -> tanh -> state_dim * action_dim
        "w1b": lin_w(ks[4], CONTEXT_DIM, HIDDEN),
        "b1b": 0.1 * jax.random.normal(ks[5], (1, HIDDEN), jnp.float32),
        "w2b": lin_w(ks[6], HIDDEN, STATE_DIM * ACTION_DIM),
        "b2b": 0.1 * jax.random.normal(ks[7], (1, STATE_DIM * ACTION_DIM), jnp.float32),
    }


def prepare_packed_params(params, adj_xx, adj_xu):
    """Fuse A/B hypernets, fold adjacency masks into second-layer weights, pack slabs.

    Pads the fused output axis (S*S + S*Au) up to a multiple of 128 lanes so the
    in-kernel tiles are full-lane (unmasked) vregs.
    """
    S = adj_xx.shape[0]
    Au = adj_xu.shape[1]
    C, H = params["w1a"].shape
    n_cols = S * S + S * Au
    npad = ((n_cols + 127) // 128) * 128
    pad = npad - n_cols

    adjxx_flat = adj_xx.reshape(1, S * S).astype(jnp.float32)
    adjxu_flat = adj_xu.reshape(1, S * Au).astype(jnp.float32)

    # first layer: [w1a | w1b] with biases stacked underneath  -> (C+1, 2H)
    w1 = jnp.concatenate([params["w1a"], params["w1b"]], axis=1)
    b1 = jnp.concatenate([params["b1a"], params["b1b"]], axis=1)
    slab1 = jnp.concatenate([w1, b1], axis=0)

    # second layer: block-diagonal, masks folded in; biases stacked -> (2H+1, NPAD)
    w2a_m = params["w2a"] * adjxx_flat
    w2b_m = params["w2b"] * adjxu_flat
    b2a_m = params["b2a"] * adjxx_flat
    b2b_m = params["b2b"] * adjxu_flat
    top = jnp.concatenate([w2a_m, jnp.zeros((H, S * Au), jnp.float32)], axis=1)
    bot = jnp.concatenate([jnp.zeros((H, S * S), jnp.float32), w2b_m], axis=1)
    w2 = jnp.concatenate([top, bot], axis=0)
    b2 = jnp.concatenate([b2a_m, b2b_m], axis=1)
    slab2 = jnp.concatenate([w2, b2], axis=0)
    slab2 = jnp.pad(slab2, ((0, 0), (0, pad)))                       # (2H+1, NPAD)

    # stacked group-sum matrix: rows 0..S*S-1 sum length-S groups, next rows length-Au
    ga = (jnp.arange(S * S)[:, None] // S == jnp.arange(S)[None, :]).astype(jnp.float32)
    gb = (jnp.arange(S * Au)[:, None] // Au == jnp.arange(S)[None, :]).astype(jnp.float32)
    g = jnp.concatenate([ga, gb], axis=0)
    g = jnp.pad(g, ((0, pad), (0, 0)))                               # (NPAD, S)

    return {"slab1": slab1, "slab2": slab2, "g": g}


# --------------------------------------------------------------------------
# pure-JAX references (mirror the PyTorch module)
# --------------------------------------------------------------------------
def reference_forward(x, u, context, params, adj_xx, adj_xu):
    h_a = jnp.tanh(context @ params["w1a"] + params["b1a"])
    a_flat = h_a @ params["w2a"] + params["b2a"]
    A_mat = a_flat.reshape(-1, STATE_DIM, STATE_DIM) * adj_xx[None]
    y_a = jnp.einsum("bij,bj->bi", A_mat, x)

    h_b = jnp.tanh(context @ params["w1b"] + params["b1b"])
    b_flat = h_b @ params["w2b"] + params["b2b"]
    B_mat = b_flat.reshape(-1, STATE_DIM, ACTION_DIM) * adj_xu[None]
    y_b = jnp.einsum("bij,bj->bi", B_mat, u)
    return y_a + y_b


def reference_rollout(x0, context, us, params, adj_xx, adj_xu, z_max):
    xs = []
    x = x0
    for t in range(us.shape[1]):
        x = reference_forward(x, us[:, t, :], context + t / z_max,
                              params, adj_xx, adj_xu)
        xs.append(x)
    return jnp.stack(xs, axis=1)     # (B, T, S)


if __name__ == "__main__":
    key = jax.random.PRNGKey(0)
    k_par, k_x, k_u, k_c, k_us = jax.random.split(key, 5)

    params = init_params(k_par)

    # deterministic adjacency masks (adj_xx: S x S lower-triangular, adj_xu: checkerboard)
    adj_xx = (jnp.arange(STATE_DIM)[:, None] >= jnp.arange(STATE_DIM)[None, :]
              ).astype(jnp.float32)
    adj_xu = ((jnp.arange(STATE_DIM)[:, None] + jnp.arange(ACTION_DIM)[None, :]) % 2
              == 0).astype(jnp.float32)

    packed = prepare_packed_params(params, adj_xx, adj_xu)

    x = jax.random.normal(k_x, (BATCH, STATE_DIM), jnp.float32)
    u = jax.random.normal(k_u, (BATCH, ACTION_DIM), jnp.float32)
    context = jax.random.normal(k_c, (BATCH, CONTEXT_DIM), jnp.float32)
    us = jax.random.normal(k_us, (BATCH, ROLLOUT_STEPS, ACTION_DIM), jnp.float32)

    # ---- single-step forward ----
    out = jax.block_until_ready(time_variant_hyper_linear_ssm(x, u, context, packed))
    ref = reference_forward(x, u, context, params, adj_xx, adj_xu)
    assert out.shape == (BATCH, STATE_DIM)
    assert jnp.allclose(out, ref, atol=1e-3, rtol=1e-3), "forward mismatch vs reference"

    # ---- fused rollout (one grid-less pallas_call, batched hypernet pre-pass) ----
    xs = jax.block_until_ready(
        time_variant_hyper_linear_ssm_rollout(x, context, us, packed, Z_MAX))
    xs_ref = reference_rollout(x, context, us, params, adj_xx, adj_xu, Z_MAX)
    assert xs.shape == (BATCH, ROLLOUT_STEPS, STATE_DIM)
    assert jnp.allclose(xs, xs_ref, atol=1e-3, rtol=1e-3), "rollout mismatch vs reference"

    print("KERNEL_OK")
</pallas_src>

<mosaic_0001>
module attributes {stable_mosaic.version = 11 : i64} {
  func.func @_forward_kernel(%arg0: memref<8x8xf32, #tpu.memory_space<vmem>>, %arg1: memref<8x4xf32, #tpu.memory_space<vmem>>, %arg2: memref<8x4xf32, #tpu.memory_space<vmem>>, %arg3: memref<5x64xf32, #tpu.memory_space<vmem>>, %arg4: memref<65x128xf32, #tpu.memory_space<vmem>>, %arg5: memref<128x8xf32, #tpu.memory_space<vmem>>, %arg6: memref<8x8xf32, #tpu.memory_space<vmem>>) attributes {dimension_semantics = [], scalar_prefetch = 0 : i64, scratch_operands = 0 : i64, tpu.core_type = #tpu.core_type<tc>} {
    %c0 = arith.constant 0 : index
    %c0_0 = arith.constant 0 : index
    %0 = vector.load %arg0[%c0, %c0_0] : memref<8x8xf32, #tpu.memory_space<vmem>>, vector<8x8xf32>
    %c0_1 = arith.constant 0 : index
    %c0_2 = arith.constant 0 : index
    %1 = vector.load %arg1[%c0_1, %c0_2] : memref<8x4xf32, #tpu.memory_space<vmem>>, vector<8x4xf32>
    %c0_3 = arith.constant 0 : index
    %c0_4 = arith.constant 0 : index
    %2 = vector.load %arg2[%c0_3, %c0_4] : memref<8x4xf32, #tpu.memory_space<vmem>>, vector<8x4xf32>
    %c0_5 = arith.constant 0 : index
    %c0_6 = arith.constant 0 : index
    %3 = vector.load %arg3[%c0_5, %c0_6] : memref<5x64xf32, #tpu.memory_space<vmem>>, vector<4x64xf32>
    %c4 = arith.constant 4 : index
    %c0_7 = arith.constant 0 : index
    %4 = vector.load %arg3[%c4, %c0_7] : memref<5x64xf32, #tpu.memory_space<vmem>>, vector<1x64xf32>
    %cst = arith.constant dense<0.000000e+00> : vector<8x64xf32>
    %5 = tpu.matmul %2, %3, %cst {dimension_numbers = #tpu.dot_dimension_numbers<[1], [0], [0], [1], [0, 0, 1, 1], [], []>} : vector<8x4xf32>, vector<4x64xf32>, vector<8x64xf32> -> vector<8x64xf32>
    %6 = vector.broadcast %4 : vector<1x64xf32> to vector<8x64xf32>
    %7 = arith.addf %5, %6 : vector<8x64xf32>
    %8 = math.tanh %7 : vector<8x64xf32>
    %c0_8 = arith.constant 0 : index
    %c0_9 = arith.constant 0 : index
    %9 = vector.load %arg4[%c0_8, %c0_9] : memref<65x128xf32, #tpu.memory_space<vmem>>, vector<64x128xf32>
    %c64 = arith.constant 64 : index
    %c0_10 = arith.constant 0 : index
    %10 = vector.load %arg4[%c64, %c0_10] : memref<65x128xf32, #tpu.memory_space<vmem>>, vector<1x128xf32>
    %cst_11 = arith.constant dense<0.000000e+00> : vector<8x128xf32>
    %11 = tpu.matmul %8, %9, %cst_11 {dimension_numbers = #tpu.dot_dimension_numbers<[1], [0], [0], [1], [0, 0, 1, 1], [], []>} : vector<8x64xf32>, vector<64x128xf32>, vector<8x128xf32> -> vector<8x128xf32>
    %12 = vector.broadcast %10 : vector<1x128xf32> to vector<8x128xf32>
    %13 = arith.addf %11, %12 : vector<8x128xf32>
    %14 = tpu.concatenate %0, %0, %0, %0, %0, %0, %0, %0 in 1 : vector<8x8xf32>, vector<8x8xf32>, vector<8x8xf32>, vector<8x8xf32>, vector<8x8xf32>, vector<8x8xf32>, vector<8x8xf32>, vector<8x8xf32> -> vector<8x64xf32>
    %15 = tpu.concatenate %1, %1, %1, %1, %1, %1, %1, %1 in 1 : vector<8x4xf32>, vector<8x4xf32>, vector<8x4xf32>, vector<8x4xf32>, vector<8x4xf32>, vector<8x4xf32>, vector<8x4xf32>, vector<8x4xf32> -> vector<8x32xf32>
    %cst_12 = arith.constant 0.000000e+00 : f32
    %16 = vector.broadcast %cst_12 : f32 to vector<8x32xf32>
    %17 = tpu.concatenate %14, %15, %16 in 1 : vector<8x64xf32>, vector<8x32xf32>, vector<8x32xf32> -> vector<8x128xf32>
    %18 = arith.mulf %13, %17 : vector<8x128xf32>
    %c0_13 = arith.constant 0 : index
    %c0_14 = arith.constant 0 : index
    %19 = vector.load %arg5[%c0_13, %c0_14] : memref<128x8xf32, #tpu.memory_space<vmem>>, vector<128x8xf32>
    %cst_15 = arith.constant dense<0.000000e+00> : vector<8x8xf32>
    %20 = tpu.matmul %18, %19, %cst_15 {dimension_numbers = #tpu.dot_dimension_numbers<[1], [0], [0], [1], [0, 0, 1, 1], [], []>} : vector<8x128xf32>, vector<128x8xf32>, vector<8x8xf32> -> vector<8x8xf32>
    %c0_16 = arith.constant 0 : index
    %c0_17 = arith.constant 0 : index
    %21 = vector.load %arg6[%c0_16, %c0_17] : memref<8x8xf32, #tpu.memory_space<vmem>>, vector<8x8xf32>
    tpu.vector_store %arg6[%c0_16, %c0_17], %20 {strides = array<i32>} : memref<8x8xf32, #tpu.memory_space<vmem>>, vector<8x8xf32>,
    return
  }
}

</mosaic_0001>

<llo_original>
// kernel: tpu_custom_call.1
$region0: #{tpu_custom_call.1}
  #allocation0 [shape = 'u32[]', space=smem, size = 0x4, offset = 0x4, fixed_abs, tag = 'smem constant byte address 0x4 - core index']
  #allocation1 [shape = 'u32[144,128]{1,0:T(1,128)}', space=vmem, size = 0x12000, scoped, tag = 'internal scratch']
  %s0 = inlined_call_operand.vmem [shape: f32[8,8], index: 0, kind: input, shape index: {}]
  %s1 = inlined_call_operand.vmem [shape: f32[8,4], index: 1, kind: input, shape index: {}]
  %s2 = inlined_call_operand.vmem [shape: f32[8,4], index: 2, kind: input, shape index: {}]
  %s3 = inlined_call_operand.vmem [shape: f32[5,64], index: 3, kind: input, shape index: {}]
  %s4 = inlined_call_operand.vmem [shape: f32[65,128], index: 4, kind: input, shape index: {}]
  %s5 = inlined_call_operand.vmem [shape: f32[128,8], index: 5, kind: input, shape index: {}]
  %s6 = inlined_call_operand.hbm [shape: f32[8,8], index: 6, kind: output, shape index: {}]
  %s7 = sld [smem:[#allocation0]]
  $region34: #{tpu_custom_call.1} parent=0
    _
  %s9 = ssub.s32 1, %s7
  %s10 = scalar_select 0, %s9, %s7
  $region1: #{tpu_custom_call.1} parent=0
    #allocation2 [shape = 'u8[4096]{0}', space=vmem, size = 0x1000, scoped, tag = 'output window, operand 0, single buffered']
    #allocation3 [shape = 's32[1]{0}', space=sflag, size = 0x4, scoped, tag = 'scoped memory for tpu_custom_call.1']
    %11 = vsyncpa [#allocation3], 0
    // Predicated region
    $region2: #{tpu_custom_call.1} parent=1 // pred_check
      _
    $region3: #{tpu_custom_call.1} parent=1 // pred_check_branch
      %13 = sbr.rel (0) target = $region5
    $region4: #{tpu_custom_call.1} parent=1 // pred_region
      _
    $region5: #{tpu_custom_call.1} parent=1 // pred_fallthru
      _
    // Predicated region
    $region6: #{tpu_custom_call.1} parent=1 // pred_check
      _
    $region7: #{tpu_custom_call.1} parent=1 // pred_check_branch
      %15 = sbr.rel (0) target = $region9
    $region8: #{tpu_custom_call.1} parent=1 // pred_region
      _
    $region9: #{tpu_custom_call.1} parent=1 // pred_fallthru
      _
    // Predicated region
    $region10: #{tpu_custom_call.1} parent=1 // pred_check
      _
    $region11: #{tpu_custom_call.1} parent=1 // pred_check_branch
      %17 = sbr.rel (0) target = $region13
    $region12: #{tpu_custom_call.1} parent=1 // pred_region
      _
    $region13: #{tpu_custom_call.1} parent=1 // pred_fallthru
      _
    // Predicated region
    $region14: #{tpu_custom_call.1} parent=1 // pred_check
      _
    $region15: #{tpu_custom_call.1} parent=1 // pred_check_branch
      %19 = sbr.rel (0) target = $region17
    $region16: #{tpu_custom_call.1} parent=1 // pred_region
      _
    $region17: #{tpu_custom_call.1} parent=1 // pred_fallthru
      _
    // Predicated region
    $region18: #{tpu_custom_call.1} parent=1 // pred_check
      _
    $region19: #{tpu_custom_call.1} parent=1 // pred_check_branch
      %21 = sbr.rel (0) target = $region21
    $region20: #{tpu_custom_call.1} parent=1 // pred_region
      _
    $region21: #{tpu_custom_call.1} parent=1 // pred_fallthru
      _
    // Predicated region
    $region22: #{tpu_custom_call.1} parent=1 // pred_check
      _
    $region23: #{tpu_custom_call.1} parent=1 // pred_check_branch
      %23 = sbr.rel (0) target = $region25
    $region24: #{tpu_custom_call.1} parent=1 // pred_region
      _
    $region25: #{tpu_custom_call.1} parent=1 // pred_fallthru
      _
    %v24 = vld [vmem:[%s0] sm:$0xff]
    %v25 = vld [vmem:[%s1] sm:$0xff]
    %v26 = vld [vmem:[%s2] sm:$0xff]
    %v27 = vld [vmem:[%s3] sm:$0xf]
    %v28 = vld [vmem:[%s3 + $0x4] sm:$0x1]
    %v29 = vlaneseq
    %v30 = vshrl.u32 %v29, 7
    %v31 = vsub.s32 0, %v30
    %v32 = vrot.slane %v28, %v31
    %vm33 = vcmask 31744
    %v35 = vsel %vm33, %v26, 0
    %vm37 = vcmask 1043456
    %v39 = vsel %vm37, %v27, 0
    %41 = vmatprep.subr.mxu0 0.0
    %42 = vmatpush1.msra.mxu0 0.0
    %43 = vmatprep.subr.mxu0 0.0
    %44 = vmatpush1.msra.mxu0 0.0
    %45 = vmatprep.subr.mxu0 0.0
    %46 = vmatpush1.msra.mxu0 0.0
    %47 = vmatprep.subr.mxu0 0.0
    %48 = vmatpush1.msra.mxu0 0.0
    %49 = vmatprep.subr.mxu0 0.0
    %50 = vmatpush1.msra.mxu0 0.0
    %51 = vmatprep.subr.mxu0 0.0
    %52 = vmatpush1.msra.mxu0 0.0
    %53 = vmatprep.subr.mxu0 0.0
    %54 = vmatpush1.msra.mxu0 0.0
    %55 = vmatprep.subr.mxu0 0.0
    %56 = vmatpush1.msra.mxu0 0.0
    %57 = vmatprep.subr.mxu0 0.0
    %58 = vmatpush1.msra.mxu0 0.0
    %59 = vmatprep.subr.mxu0 0.0
    %60 = vmatpush1.msra.mxu0 0.0
    %61 = vmatprep.subr.mxu0 0.0
    %62 = vmatpush1.msra.mxu0 0.0
    %63 = vmatprep.subr.mxu0 0.0
    %64 = vmatpush1.msra.mxu0 0.0
    %65 = vmatprep.subr.mxu0 0.0
    %66 = vmatpush1.msra.mxu0 0.0
    %67 = vmatprep.subr.mxu0 0.0
    %68 = vmatpush1.msra.mxu0 0.0
    %69 = vmatprep.subr.mxu0 0.0
    %70 = vmatpush1.msra.mxu0 0.0
    %71 = vmatprep.subr.mxu0 0.0
    %72 = vmatpush1.msra.mxu0 %v39
    %73 = vmatprep.subr.mxu0 0.0
    %74 = vmatpush2.msra.mxu0 0.0
    %75 = vmatprep.subr.mxu0 0.0
    %76 = vmatpush2.msra.mxu0 0.0
    %77 = vmatprep.subr.mxu0 0.0
    %78 = vmatpush2.msra.mxu0 0.0
    %79 = vmatprep.subr.mxu0 0.0
    %80 = vmatpush2.msra.mxu0 0.0
    %81 = vmatprep.subr.mxu0 0.0
    %82 = vmatpush2.msra.mxu0 0.0
    %83 = vmatprep.subr.mxu0 0.0
    %84 = vmatpush2.msra.mxu0 0.0
    %85 = vmatprep.subr.mxu0 0.0
    %86 = vmatpush2.msra.mxu0 0.0
    %87 = vmatprep.subr.mxu0 0.0
    %88 = vmatpush2.msra.mxu0 0.0
    %89 = vmatprep.subr.mxu0 0.0
    %90 = vmatpush2.msra.mxu0 0.0
    %91 = vmatprep.subr.mxu0 0.0
    %92 = vmatpush2.msra.mxu0 0.0
    %93 = vmatprep.subr.mxu0 0.0
    %94 = vmatpush2.msra.mxu0 0.0
    %95 = vmatprep.subr.mxu0 0.0
    %96 = vmatpush2.msra.mxu0 0.0
    %97 = vmatprep.subr.mxu0 0.0
    %98 = vmatpush2.msra.mxu0 0.0
    %99 = vmatprep.subr.mxu0 0.0
    %100 = vmatpush2.msra.mxu0 0.0
    %101 = vmatprep.subr.mxu0 0.0
    %102 = vmatpush2.msra.mxu0 0.0
    %103 = vmatprep.subr.mxu0 0.0
    %104 = vmatpush2.msra.mxu0 0.0
    %105 = vmatprep.mubr.f32.mxu0 0.0
    %106 = vmatmul.mubr.f32.gmra.mxu0 %v35
    %v107 = vpop.f32.mrf.mxu0
    %v108 = vadd.f32 %v32, %v107
    %v109 = vpop.f32.mrf.mxu0
    %110 = vdwg.mxu0
    %v111 = vtanh.pop %v108
    %v112 = vld [vmem:[%s4] sm:$0xff]
    %v113 = vld [vmem:[%s4 + $0x8] sm:$0xff]
    %v114 = vld [vmem:[%s4 + $0x10] sm:$0xff]
    %v115 = vld [vmem:[%s4 + $0x18] sm:$0xff]
    %v116 = vld [vmem:[%s4 + $0x20] sm:$0xff]
    %v117 = vld [vmem:[%s4 + $0x28] sm:$0xff]
    %v118 = vld [vmem:[%s4 + $0x30] sm:$0xff]
    %v119 = vld [vmem:[%s4 + $0x38] sm:$0xff]
    %v120 = vld [vmem:[%s4 + $0x40] sm:$0x1]
    %v121 = vlaneseq
    %v122 = vshrl.u32 %v121, 7
    %v123 = vsub.s32 0, %v122
    %v124 = vrot.slane %v120, %v123
    %vm125 = vcmask 523264
    %v127 = vsel %vm125, %v111, 0
    %129 = vmatprep.subr.mxu0 0.0
    %130 = vmatpush1.msra.mxu0 0.0
    %131 = vmatprep.subr.mxu0 0.0
    %132 = vmatpush1.msra.mxu0 0.0
    %133 = vmatprep.subr.mxu0 0.0
    %134 = vmatpush1.msra.mxu0 0.0
    %135 = vmatprep.subr.mxu0 0.0
    %136 = vmatpush1.msra.mxu0 0.0
    %137 = vmatprep.subr.mxu0 0.0
    %138 = vmatpush1.msra.mxu0 0.0
    %139 = vmatprep.subr.mxu0 0.0
    %140 = vmatpush1.msra.mxu0 0.0
    %141 = vmatprep.subr.mxu0 0.0
    %142 = vmatpush1.msra.mxu0 0.0
    %143 = vmatprep.subr.mxu0 0.0
    %144 = vmatpush1.msra.mxu0 0.0
    %145 = vmatprep.subr.mxu0 0.0
    %146 = vmatpush1.msra.mxu0 %v119
    %147 = vmatprep.subr.mxu0 0.0
    %148 = vmatpush1.msra.mxu0 %v118
    %149 = vmatprep.subr.mxu0 0.0
    %150 = vmatpush1.msra.mxu0 %v117
    %151 = vmatprep.subr.mxu0 0.0
    %152 = vmatpush1.msra.mxu0 %v116
    %153 = vmatprep.subr.mxu0 0.0
    %154 = vmatpush1.msra.mxu0 %v115
    %155 = vmatprep.subr.mxu0 0.0
    %156 = vmatpush1.msra.mxu0 %v114
    %157 = vmatprep.subr.mxu0 0.0
    %158 = vmatpush1.msra.mxu0 %v113
    %159 = vmatprep.subr.mxu0 0.0
    %160 = vmatpush1.msra.mxu0 %v112
    %161 = vmatprep.subr.mxu0 0.0
    %162 = vmatpush2.msra.mxu0 0.0
    %163 = vmatprep.subr.mxu0 0.0
    %164 = vmatpush2.msra.mxu0 0.0
    %165 = vmatprep.subr.mxu0 0.0
    %166 = vmatpush2.msra.mxu0 0.0
    %167 = vmatprep.subr.mxu0 0.0
    %168 = vmatpush2.msra.mxu0 0.0
    %169 = vmatprep.subr.mxu0 0.0
    %170 = vmatpush2.msra.mxu0 0.0
    %171 = vmatprep.subr.mxu0 0.0
    %172 = vmatpush2.msra.mxu0 0.0
    %173 = vmatprep.subr.mxu0 0.0
    %174 = vmatpush2.msra.mxu0 0.0
    %175 = vmatprep.subr.mxu0 0.0
    %176 = vmatpush2.msra.mxu0 0.0
    %177 = vmatprep.subr.mxu0 0.0
    %178 = vmatpush2.msra.mxu0 0.0
    %179 = vmatprep.subr.mxu0 0.0
    %180 = vmatpush2.msra.mxu0 0.0
    %181 = vmatprep.subr.mxu0 0.0
    %182 = vmatpush2.msra.mxu0 0.0
    %183 = vmatprep.subr.mxu0 0.0
    %184 = vmatpush2.msra.mxu0 0.0
    %185 = vmatprep.subr.mxu0 0.0
    %186 = vmatpush2.msra.mxu0 0.0
    %187 = vmatprep.subr.mxu0 0.0
    %188 = vmatpush2.msra.mxu0 0.0
    %189 = vmatprep.subr.mxu0 0.0
    %190 = vmatpush2.msra.mxu0 0.0
    %191 = vmatprep.subr.mxu0 0.0
    %192 = vmatpush2.msra.mxu0 0.0
    %193 = vmatprep.mubr.f32.mxu0 0.0
    %194 = vmatmul.mubr.f32.gmra.mxu0 %v127
    %v195 = vpop.f32.mrf.mxu0
    %v196 = vadd.f32 %v124, %v195
    %v197 = vpop.f32.mrf.mxu0
    %198 = vdwg.mxu0
    %200 = vrot.lane.b32.xlu0 %v24, 8
    %v201 = vpop.permute.xlu0 %200
    %203 = vrot.lane.b32.xlu0 %v24, 16
    %v204 = vpop.permute.xlu0 %203
    %206 = vrot.lane.b32.xlu0 %v24, 24
    %v207 = vpop.permute.xlu0 %206
    %209 = vrot.lane.b32.xlu0 %v24, 32
    %v210 = vpop.permute.xlu0 %209
    %212 = vrot.lane.b32.xlu0 %v24, 40
    %v213 = vpop.permute.xlu0 %212
    %215 = vrot.lane.b32.xlu0 %v24, 48
    %v216 = vpop.permute.xlu0 %215
    %218 = vrot.lane.b32.xlu0 %v24, 56
    %v219 = vpop.permute.xlu0 %218
    %vm221 = vcmask 64512
    %v222 = vsel %vm221, %v24, %v201
    %vm223 = vcmask 130048
    %v224 = vsel %vm223, %v222, %v204
    %vm225 = vcmask 195584
    %v226 = vsel %vm225, %v224, %v207
    %vm227 = vcmask 261120
    %v228 = vsel %vm227, %v226, %v210
    %vm229 = vcmask 326656
    %v230 = vsel %vm229, %v228, %v213
    %vm231 = vcmask 392192
    %v232 = vsel %vm231, %v230, %v216
    %vm233 = vcmask 457728
    %v234 = vsel %vm233, %v232, %v219
    %236 = vrot.lane.b32.xlu0 %v25, 4
    %v237 = vpop.permute.xlu0 %236
    %239 = vrot.lane.b32.xlu0 %v25, 8
    %v240 = vpop.permute.xlu0 %239
    %242 = vrot.lane.b32.xlu0 %v25, 12
    %v243 = vpop.permute.xlu0 %242
    %245 = vrot.lane.b32.xlu0 %v25, 16
    %v246 = vpop.permute.xlu0 %245
    %248 = vrot.lane.b32.xlu0 %v25, 20
    %v249 = vpop.permute.xlu0 %248
    %251 = vrot.lane.b32.xlu0 %v25, 24
    %v252 = vpop.permute.xlu0 %251
    %254 = vrot.lane.b32.xlu0 %v25, 28
    %v255 = vpop.permute.xlu0 %254
    %v257 = vsel %vm33, %v25, %v237
    %v258 = vsel %vm221, %v257, %v240
    %vm259 = vcmask 97280
    %v260 = vsel %vm259, %v258, %v243
    %v261 = vsel %vm223, %v260, %v246
    %vm262 = vcmask 162816
    %v263 = vsel %vm262, %v261, %v249
    %v264 = vsel %vm225, %v263, %v252
    %vm265 = vcmask 228352
    %v266 = vsel %vm265, %v264, %v255
    %268 = vrot.lane.b32.xlu0 %v266, 64
    %v269 = vpop.permute.xlu0 %268
    %v271 = vsel %vm125, %v234, %v269
    %vm272 = vcmask 785408
    %v273 = vsel %vm272, %v271, 0.0
    %v274 = vmul.f32 %v196, %v273
    %v275 = vld [vmem:[%s5] sm:$0xff]
    %v276 = vld [vmem:[%s5 + $0x8] sm:$0xff]
    %v277 = vld [vmem:[%s5 + $0x10] sm:$0xff]
    %v278 = vld [vmem:[%s5 + $0x18] sm:$0xff]
    %v279 = vld [vmem:[%s5 + $0x20] sm:$0xff]
    %v280 = vld [vmem:[%s5 + $0x28] sm:$0xff]
    %v281 = vld [vmem:[%s5 + $0x30] sm:$0xff]
    %v282 = vld [vmem:[%s5 + $0x38] sm:$0xff]
    %v283 = vld [vmem:[%s5 + $0x40] sm:$0xff]
    %v284 = vld [vmem:[%s5 + $0x48] sm:$0xff]
    %v285 = vld [vmem:[%s5 + $0x50] sm:$0xff]
    %v286 = vld [vmem:[%s5 + $0x58] sm:$0xff]
    %v287 = vld [vmem:[%s5 + $0x60] sm:$0xff]
    %v288 = vld [vmem:[%s5 + $0x68] sm:$0xff]
    %v289 = vld [vmem:[%s5 + $0x70] sm:$0xff]
    %v290 = vld [vmem:[%s5 + $0x78] sm:$0xff]
    %291 = vmatprep.subr.mxu0 0.0
    %292 = vmatpush1.msra.mxu0 %v290
    %293 = vmatprep.subr.mxu0 0.0
    %294 = vmatpush1.msra.mxu0 %v289
    %295 = vmatprep.subr.mxu0 0.0
    %296 = vmatpush1.msra.mxu0 %v288
    %297 = vmatprep.subr.mxu0 0.0
    %298 = vmatpush1.msra.mxu0 %v287
    %299 = vmatprep.subr.mxu0 0.0
    %300 = vmatpush1.msra.mxu0 %v286
    %301 = vmatprep.subr.mxu0 0.0
    %302 = vmatpush1.msra.mxu0 %v285
    %303 = vmatprep.subr.mxu0 0.0
    %304 = vmatpush1.msra.mxu0 %v284
    %305 = vmatprep.subr.mxu0 0.0
    %306 = vmatpush1.msra.mxu0 %v283
    %307 = vmatprep.subr.mxu0 0.0
    %308 = vmatpush1.msra.mxu0 %v282
    %309 = vmatprep.subr.mxu0 0.0
    %310 = vmatpush1.msra.mxu0 %v281
    %311 = vmatprep.subr.mxu0 0.0
    %312 = vmatpush1.msra.mxu0 %v280
    %313 = vmatprep.subr.mxu0 0.0
    %314 = vmatpush1.msra.mxu0 %v279
    %315 = vmatprep.subr.mxu0 0.0
    %316 = vmatpush1.msra.mxu0 %v278
    %317 = vmatprep.subr.mxu0 0.0
    %318 = vmatpush1.msra.mxu0 %v277
    %319 = vmatprep.subr.mxu0 0.0
    %320 = vmatpush1.msra.mxu0 %v276
    %321 = vmatprep.subr.mxu0 0.0
    %322 = vmatpush1.msra.mxu0 %v275
    %323 = vmatprep.subr.mxu0 0.0
    %324 = vmatpush2.msra.mxu0 0.0
    %325 = vmatprep.subr.mxu0 0.0
    %326 = vmatpush2.msra.mxu0 0.0
    %327 = vmatprep.subr.mxu0 0.0
    %328 = vmatpush2.msra.mxu0 0.0
    %329 = vmatprep.subr.mxu0 0.0
    %330 = vmatpush2.msra.mxu0 0.0
    %331 = vmatprep.subr.mxu0 0.0
    %332 = vmatpush2.msra.mxu0 0.0
    %333 = vmatprep.subr.mxu0 0.0
    %334 = vmatpush2.msra.mxu0 0.0
    %335 = vmatprep.subr.mxu0 0.0
    %336 = vmatpush2.msra.mxu0 0.0
    %337 = vmatprep.subr.mxu0 0.0
    %338 = vmatpush2.msra.mxu0 0.0
    %339 = vmatprep.subr.mxu0 0.0
    %340 = vmatpush2.msra.mxu0 0.0
    %341 = vmatprep.subr.mxu0 0.0
    %342 = vmatpush2.msra.mxu0 0.0
    %343 = vmatprep.subr.mxu0 0.0
    %344 = vmatpush2.msra.mxu0 0.0
    %345 = vmatprep.subr.mxu0 0.0
    %346 = vmatpush2.msra.mxu0 0.0
    %347 = vmatprep.subr.mxu0 0.0
    %348 = vmatpush2.msra.mxu0 0.0
    %349 = vmatprep.subr.mxu0 0.0
    %350 = vmatpush2.msra.mxu0 0.0
    %351 = vmatprep.subr.mxu0 0.0
    %352 = vmatpush2.msra.mxu0 0.0
    %353 = vmatprep.subr.mxu0 0.0
    %354 = vmatpush2.msra.mxu0 0.0
    %355 = vmatprep.mubr.f32.mxu0 0.0
    %356 = vmatmul.mubr.f32.gmra.mxu0 %v274
    %v357 = vpop.f32.mrf.mxu0
    %v358 = vadd.f32 0.0, %v357
    %v359 = vpop.f32.mrf.mxu0
    %360 = vdwg.mxu0
    %361 = vst.msk [vmem:[#allocation2] sm:$0xff] %vm221, %v358
    // Predicated region
    $region26: #{tpu_custom_call.1} parent=1 // pred_check
      _
    $region27: #{tpu_custom_call.1} parent=1 // pred_check_branch
      %363 = sbr.rel (0) target = $region29
    $region28: #{tpu_custom_call.1} parent=1 // pred_region
      %s365 = ssub.s32 128, 128
      %366 = vsyncadd [#allocation3], %s365
      %s368 = sshll.u32 [#allocation2], 4
      %s369 = int_to_ptr.vmem [resolvable:$true] %s368
      %371 = dma.vmem_to_hbm [thread:$0]  %s369, 128, %s6, [#allocation3]
    $region29: #{tpu_custom_call.1} parent=1 // pred_fallthru
      _
    // Predicated region
    $region30: #{tpu_custom_call.1} parent=1 // pred_check
      _
    $region31: #{tpu_custom_call.1} parent=1 // pred_check_branch
      %373 = sbr.rel (0) target = $region33
    $region32: #{tpu_custom_call.1} parent=1 // pred_region
      %374 = dma.done [#allocation3], 128
    $region33: #{tpu_custom_call.1} parent=1 // pred_fallthru
      _
    %375 = vsyncpa [#allocation3], 1

</llo_original>
